<compile_context>
chip_gen: v5e
topology: v5e:2x2
jax: 0.10.0
libtpu: 0.0.40
codegen_flags: <defaults>
</compile_context>

<pallas_src>
import math
from functools import partial

import jax
import jax.numpy as jnp
from jax.experimental import pallas as pl
from jax.experimental.pallas import tpu as pltpu

_LANES = 128
_SUBLANE = {4: 8, 2: 16, 1: 32}  # sublane alignment per itemsize


# ---------------------------------------------------------------------------
# Forward pass (SLACK.forward): identity pass-through — zero-cost.
# ---------------------------------------------------------------------------
def slack_forward(data):
    """SLACK.forward(data) -> data. Identity; no kernel, no HBM traffic."""
    return data


# ---------------------------------------------------------------------------
# Optional Pallas kernel: tiled, pipelined materializing copy of the batch.
# ---------------------------------------------------------------------------
def _copy_kernel(x_ref, o_ref):
    o_ref[...] = x_ref[...]


def _round_up(x, m):
    return -(-x // m) * m


def _round_down(x, m):
    return (x // m) * m


def _default_tile_bytes():
    """Per-generation tile size: 2 MiB on v5e (16 MiB scoped-VMEM default),
    4 MiB on v6e / v7x (amortizes the ~0.35 us per-grid-step overhead)."""
    try:
        kind = jax.devices()[0].device_kind.lower()
    except Exception:
        return 1 << 20
    if "v5" in kind:
        return 2 << 20
    return 4 << 20


@partial(jax.jit, static_argnames=("tile_bytes",))
def _pallas_copy(data, *, tile_bytes):
    shape = data.shape
    dtype = data.dtype
    total = int(data.size)
    itemsize = jnp.dtype(dtype).itemsize
    cparams = pltpu.CompilerParams(
        dimension_semantics=("parallel",),
        vmem_limit_bytes=max(16 << 20, 6 * tile_bytes),
    )

    def lane_dense_copy(flat2d, rows):
        """(rows,128) slab copy; tile_rows is sublane-aligned, grid >= 2 when
        possible so 'parallel' shards across both TensorCores (v7x)."""
        sub = _SUBLANE[itemsize]
        tile_rows = max(sub, _round_down(tile_bytes // (_LANES * itemsize), sub))
        tile_rows = min(tile_rows, _round_up(rows, sub))
        if rows >= 2 * sub:
            tile_rows = min(tile_rows, max(sub, _round_down(rows // 2, sub)))
        return pl.pallas_call(
            _copy_kernel,
            out_shape=jax.ShapeDtypeStruct((rows, _LANES), dtype),
            grid=(pl.cdiv(rows, tile_rows),),
            in_specs=[pl.BlockSpec((tile_rows, _LANES), lambda i: (i, 0))],
            out_specs=pl.BlockSpec((tile_rows, _LANES), lambda i: (i, 0)),
            compiler_params=cparams,
        )(flat2d)

    # ---- Path A: aligned — lane-dense (rows,128) view, no pad, no slice. ----
    if itemsize in _SUBLANE and total % _LANES == 0:
        rows = total // _LANES
        flat = data.reshape(rows, _LANES)  # free metadata reshape under jit
        return lane_dense_copy(flat, rows).reshape(shape)

    # ---- Path B / C: ragged last dim (total % 128 != 0) or exotic dtype. ----
    view = data if data.ndim >= 2 else data.reshape(1, -1)
    vshape = view.shape
    nd = len(vshape)
    row_bytes = int(math.prod(vshape[1:])) * itemsize

    if row_bytes > (8 << 20) and itemsize in _SUBLANE:
        # Path C (rare): a single leading row would blow the VMEM budget —
        # fall back to a (rows,128) slab with a sub-128-element tail pad only
        # (bounded cost, fused under jit), then drop the tail.
        pad = (-total) % _LANES
        rows = (total + pad) // _LANES
        flat = jnp.pad(data.reshape(-1), (0, pad)).reshape(rows, _LANES)
        out = lane_dense_copy(flat, rows)
        return out.reshape(-1)[:total].reshape(shape)

    # Path B: tile the leading axis; trailing block dims equal the full array
    # dims, so the (8,128) constraint is satisfied with no padding.
    rb = max(1, min(vshape[0], tile_bytes // max(1, row_bytes)))
    if vshape[0] >= 2:
        rb = min(rb, max(1, vshape[0] // 2))  # keep >= 2 grid steps
    block = (rb,) + tuple(vshape[1:])
    idx_map = lambda i: (i,) + (0,) * (nd - 1)
    out = pl.pallas_call(
        _copy_kernel,
        out_shape=jax.ShapeDtypeStruct(vshape, dtype),
        grid=(pl.cdiv(vshape[0], rb),),
        in_specs=[pl.BlockSpec(block, idx_map)],
        out_specs=pl.BlockSpec(block, idx_map),
        compiler_params=cparams,
    )(view)
    return out.reshape(shape)


def slack_forward_pallas(data, *, tile_bytes=None, min_bytes=1 << 20):
    """Materialize `data` via a tiled, double-buffered Pallas copy.

    Inputs smaller than `min_bytes` skip the kernel entirely (launch overhead
    is pure loss there; forward semantics are identity either way).  Pass
    `min_bytes=0` to force the kernel.
    """
    data = jnp.asarray(data)
    nbytes = data.size * jnp.dtype(data.dtype).itemsize
    if data.size == 0 or nbytes < min_bytes:
        return data
    if tile_bytes is None:
        tile_bytes = _default_tile_bytes()
    return _pallas_copy(data, tile_bytes=int(tile_bytes))


# ---------------------------------------------------------------------------
# Parameter initialization (mirrors _initialize_augment_parameters)
# ---------------------------------------------------------------------------
def init_slack_params(n_op, n_aug, n_dmu, mu_prior=1.0, log_prior=True, mu_d=None):
    pi = jnp.zeros((n_op, n_aug), dtype=jnp.float32)
    mu_shape = (n_aug, n_dmu) if mu_d is None else (n_aug, n_dmu, mu_d)
    init_val = math.log(mu_prior) if log_prior else mu_prior
    mu = init_val * jnp.ones(mu_shape, dtype=jnp.float32)
    return pi, mu


# ---------------------------------------------------------------------------
# Genotype probabilities + sampling glue (plain JAX; launch-overhead bound).
# ---------------------------------------------------------------------------
# TODO(synk): Categorical / Dmu distribution sampling + log_prob is host-side
# stochastic control logic with no clean Pallas equivalent; done with
# jax.random here.  The pi softmax is 2x15 floats, so it stays in XLA.
def pi_probs(pi):
    """softmax(pi, dim=-1) — genotype() probabilities."""
    return jax.nn.softmax(pi, axis=-1)


def slack_sample(key, pi, mu, b_size=1):
    n_op, n_aug = pi.shape
    logp_pi = jax.nn.log_softmax(pi, axis=-1)
    ops = jax.random.categorical(key, pi, axis=-1, shape=(b_size, n_op))
    logpi = jnp.take_along_axis(
        jnp.broadcast_to(logp_pi, (b_size, n_op, n_aug)), ops[..., None], axis=-1
    )[..., 0]
    mus = mu[ops]  # (b_size, n_op, n_dmu)
    return ops, mus, logpi


if __name__ == "__main__":
    key = jax.random.PRNGKey(0)
    k_data, k_big, k_samp = jax.random.split(key, 3)

    # Small, deterministic config consistent with the module.
    n_op, n_aug, n_dmu, mu_prior = 2, 15, 2, 1.0
    pi, mu = init_slack_params(n_op, n_aug, n_dmu, mu_prior=mu_prior, log_prior=True)

    # Input data (NCHW, as a PyTorch dataloader batch would be).
    x = jax.random.normal(k_data, (2, 4, 16, 16), dtype=jnp.float32)

    # 1) Forward pass: identity (zero-cost, exactly matches SLACK.forward).
    y = jax.block_until_ready(slack_forward(x))
    assert y.shape == x.shape and y.dtype == x.dtype
    assert bool(jnp.array_equal(y, x)), "forward() must be an exact identity"

    # 2) Small-input fast path: Pallas copy bails out for tiny batches.
    y_small = jax.block_until_ready(slack_forward_pallas(x))
    assert bool(jnp.array_equal(y_small, x))

    # 3) Force the Pallas kernel on the small batch (Path A: (rows,128) slab,
    #    two-step "parallel" grid, no pad / no slice).
    y_p = jax.block_until_ready(slack_forward_pallas(x, min_bytes=0))
    assert y_p.shape == x.shape and y_p.dtype == x.dtype
    assert bool(jnp.array_equal(y_p, x)), "Pallas copy must be bit-exact"

    # 4) Ragged total (not a multiple of 128) -> Path B: natural N-D blocks
    #    with full trailing dims, no padding, no epilogue slice.
    x_odd = jax.random.normal(k_data, (3, 5, 7, 11), dtype=jnp.float32)
    y_odd = jax.block_until_ready(slack_forward_pallas(x_odd, min_bytes=0))
    assert bool(jnp.array_equal(y_odd, x_odd))

    # 5) A batch above the fast-path threshold, exercising the default tiling
    #    (2 MiB -> multi-step pipelined grid).
    x_big = jax.random.normal(k_big, (32, 128, 128), dtype=jnp.float32)
    y_big = jax.block_until_ready(slack_forward_pallas(x_big))
    assert bool(jnp.array_equal(y_big, x_big))

    # 6) Genotype probabilities (plain XLA; pi=0 -> uniform) + sampling glue.
    p = jax.block_until_ready(pi_probs(pi))
    assert bool(jnp.allclose(p, jnp.full((n_op, n_aug), 1.0 / n_aug), atol=1e-6))
    ops, mus, logpi = slack_sample(k_samp, pi, mu, b_size=3)
    jax.block_until_ready((ops, mus, logpi))

    print("KERNEL_OK")
</pallas_src>

<mosaic_0001>
module attributes {stable_mosaic.version = 11 : i64} {
  func.func @_copy_kernel(%arg0: i32, %arg1: memref<8x128xf32, #tpu.memory_space<vmem>>, %arg2: memref<8x128xf32, #tpu.memory_space<vmem>>) attributes {dimension_semantics = [#tpu.dimension_semantics<parallel>], iteration_bounds = array<i64: 2>, scalar_prefetch = 0 : i64, scratch_operands = 0 : i64, tpu.core_type = #tpu.core_type<tc>, window_params = [{transform_indices = @transform_0, window_bounds = array<i64: 8, 128>}, {transform_indices = @transform_1, window_bounds = array<i64: 8, 128>}]} {
    %c0 = arith.constant 0 : index
    %c0_0 = arith.constant 0 : index
    %0 = vector.load %arg1[%c0, %c0_0] : memref<8x128xf32, #tpu.memory_space<vmem>>, vector<8x128xf32>
    %c0_1 = arith.constant 0 : index
    %c0_2 = arith.constant 0 : index
    %1 = vector.load %arg2[%c0_1, %c0_2] : memref<8x128xf32, #tpu.memory_space<vmem>>, vector<8x128xf32>
    tpu.vector_store %arg2[%c0_1, %c0_2], %0 {strides = array<i32>} : memref<8x128xf32, #tpu.memory_space<vmem>>, vector<8x128xf32>,
    return
  }
  func.func @transform_0(%arg0: i32) -> (i32, i32) {
    %c0_i32 = arith.constant 0 : i32
    %c0_i32_0 = arith.constant 0 : i32
    return %arg0, %c0_i32 : i32, i32
  }
  func.func @transform_1(%arg0: i32) -> (i32, i32) {
    %c0_i32 = arith.constant 0 : i32
    %c0_i32_0 = arith.constant 0 : i32
    return %arg0, %c0_i32 : i32, i32
  }
}

</mosaic_0001>

<llo_original>
// kernel: _pallas_copy.1
$region0: #{_pallas_copy.1}
  #allocation0 [shape = 'u32[]', space=smem, size = 0x4, offset = 0x4, fixed_abs, tag = 'smem constant byte address 0x4 - core index']
  #allocation1 [shape = 'u32[72,128]{1,0:T(1,128)}', space=vmem, size = 0x9000, scoped, tag = 'internal scratch']
  %s0 = inlined_call_operand.vmem [shape: f32[16,128], index: 0, kind: input, shape index: {}]
  %s1 = inlined_call_operand.vmem [shape: f32[16,128], index: 1, kind: output, shape index: {}]
  %s2 = sld [smem:[#allocation0]]
  $region37: #{_pallas_copy.1} parent=0
    _
  %s4 = ssub.s32 1, %s2
  %s5 = scalar_select 0, %s4, %s2
  loop: start=0, step=1, limit=4
  $region2: #{_pallas_copy.1} parent=0 // loop_pre_header
    _
  $region3: #{_pallas_copy.1} parent=0 // loop_header
    %s7 = sphi 0, %s11
    %p8 = scmp.ge.s32.totalorder %s7, 4
    %s17 = sphi 0, %s19
    %s20 = sphi 0, %s17
    %s21 = sphi 0, %s20
    %s37 = sphi 0, %s21
    %s43 = sphi 0, %s45
    %s46 = sphi 0, %s43
    %s47 = sphi 0, %s46
    %s63 = sphi 0, %s47
  $region4: #{_pallas_copy.1} parent=0 // loop_header_branch
    %10 = sbr.rel (%p8) target = $region8
  $region5: #{_pallas_copy.1} parent=0 // loop_body
    %s12 = ssub.s32 %s7, 1
    %s13 = ssub.s32 %s7, 2
    %s14 = sadd.s32 %s7, 1
    %s15 = ssub.s32 %s7, %s14
    %p16 = scmp.eq.s32.totalorder %s15, 0
    %s18 = sadd.s32 %s17, 1
    %s19 = scalar_select %p16, %s17, %s18
    %p22 = pneg %p16
    %p23 = scmp.eq.s32.totalorder %s7, 1
    %p24 = por %p22, %p23
    %p25 = scmp.ne.s32.totalorder %s17, %s20
    %p26 = scmp.eq.s32.totalorder %s7, 0
    %p27 = por %p25, %p26
    %p28 = scmp.ne.s32.totalorder %s17, %s20
    %p29 = scmp.eq.s32.totalorder %s12, 1
    %p30 = por %p28, %p29
    %p31 = scmp.ne.s32.totalorder %s20, %s21
    %p32 = scmp.eq.s32.totalorder %s12, 0
    %p33 = por %p31, %p32
    %p34 = scmp.ne.s32.totalorder %s20, %s21
    %p35 = scmp.eq.s32.totalorder %s13, 1
    %p36 = por %p34, %p35
    %p38 = scmp.ne.s32.totalorder %s21, %s37
    %p39 = scmp.eq.s32.totalorder %s13, 0
    %p40 = por %p38, %p39
    %s41 = ssub.s32 %s7, %s14
    %p42 = scmp.eq.s32.totalorder %s41, 0
    %s44 = sadd.s32 %s43, 1
    %s45 = scalar_select %p42, %s43, %s44
    %p48 = pneg %p42
    %p49 = scmp.eq.s32.totalorder %s7, 1
    %p50 = por %p48, %p49
    %p51 = scmp.ne.s32.totalorder %s43, %s46
    %p52 = scmp.eq.s32.totalorder %s7, 0
    %p53 = por %p51, %p52
    %p54 = scmp.ne.s32.totalorder %s43, %s46
    %p55 = scmp.eq.s32.totalorder %s12, 1
    %p56 = por %p54, %p55
    %p57 = scmp.ne.s32.totalorder %s46, %s47
    %p58 = scmp.eq.s32.totalorder %s12, 0
    %p59 = por %p57, %p58
    %p60 = scmp.ne.s32.totalorder %s46, %s47
    %p61 = scmp.eq.s32.totalorder %s13, 1
    %p62 = por %p60, %p61
    %p64 = scmp.ne.s32.totalorder %s47, %s63
    %p65 = scmp.eq.s32.totalorder %s13, 0
    %p66 = por %p64, %p65
    %p67 = scmp.le.s32.totalorder 1, %s7
    %p68 = scmp.lt.s32.totalorder %s7, 3
    %p69 = pnand %p67, %p68
    %p70 = pneg %p69
    // Predicated region
    $region9: #{_pallas_copy.1} parent=5 // pred_check
      _
    $region10: #{_pallas_copy.1} parent=5 // pred_check_branch
      %72 = sbr.rel (%p69) target = $region12
    $region11: #{_pallas_copy.1} parent=5 // pred_region
      %s73 = ssub.s32 %s7, 1
    $region12: #{_pallas_copy.1} parent=5 // pred_fallthru
      _
    %p74 = scmp.lt.s32.totalorder %s7, 2
    // Predicated region
    $region13: #{_pallas_copy.1} parent=5 // pred_check
      %p75 = pneg %p74
    $region14: #{_pallas_copy.1} parent=5 // pred_check_branch
      %77 = sbr.rel (%p75) target = $region16
    $region15: #{_pallas_copy.1} parent=5 // pred_region
      // Predicated region
      $region17: #{_pallas_copy.1} parent=15 // pred_check
        %p78 = pneg %p27
      $region18: #{_pallas_copy.1} parent=15 // pred_check_branch
        %80 = sbr.rel (%p78) target = $region20
      $region19: #{_pallas_copy.1} parent=15 // pred_region
        %p81 = scmp.lt.s32.totalorder %s7, 1
        %s82 = scalar_select %p81, %s7, 1
        %s83 = smul.addr %s82, 8
        %s84 = scalar_lea.vmem %s0, %s83
      $region20: #{_pallas_copy.1} parent=15 // pred_fallthru
        _
    $region16: #{_pallas_copy.1} parent=5 // pred_fallthru
      _
    %p85 = scmp.le.s32.totalorder 1, %s7
    %p86 = scmp.lt.s32.totalorder %s7, 3
    %p87 = pnand %p85, %p86
    %p88 = pneg %p87
    // Predicated region
    $region21: #{_pallas_copy.1} parent=5 // pred_check
      _
    $region22: #{_pallas_copy.1} parent=5 // pred_check_branch
      %90 = sbr.rel (%p87) target = $region24
    $region23: #{_pallas_copy.1} parent=5 // pred_region
      %s91 = ssub.s32 %s7, 1
      %p92 = scmp.lt.s32.totalorder %s12, 1
      %s93 = scalar_select %p92, %s12, 1
      %s94 = smul.addr %s93, 8
      %s95 = scalar_lea.vmem %s0, %s94
      %p96 = pneg %p33
      %p97 = pneg %p30
      %p98 = pneg %p59
      %p99 = pneg %p56
      %p100 = scmp.lt.s32.totalorder %s12, 1
      %s101 = scalar_select %p100, %s12, 1
      %s102 = smul.addr %s101, 8
      %s103 = scalar_lea.vmem %s1, %s102
      %p104 = scmp.lt.s32.totalorder %s12, 1
      %s105 = scalar_select %p104, %s12, 1
      %s106 = smul.addr %s105, 8
      %s107 = scalar_lea.vmem %s0, %s106
      %p108 = scmp.lt.s32.totalorder %s12, 1
      %s109 = scalar_select %p108, %s12, 1
      %s110 = smul.addr %s109, 8
      %s111 = scalar_lea.vmem %s1, %s110
      %v112 = vld [vmem:[%s107] sm:$0xff]
      %113 = vst [vmem:[%s111] sm:$0xff] %v112
      %p114 = scmp.lt.s32.totalorder %s12, 1
      %s115 = scalar_select %p114, %s12, 1
      %s116 = smul.addr %s115, 8
      %s117 = scalar_lea.vmem %s1, %s116
      // Predicated region
      $region25: #{_pallas_copy.1} parent=23 // pred_check
        %p118 = pneg %p56
      $region26: #{_pallas_copy.1} parent=23 // pred_check_branch
        %120 = sbr.rel (%p118) target = $region28
      $region27: #{_pallas_copy.1} parent=23 // pred_region
        _
      $region28: #{_pallas_copy.1} parent=23 // pred_fallthru
        _
    $region24: #{_pallas_copy.1} parent=5 // pred_fallthru
      _
    %p121 = scmp.le.s32.totalorder 2, %s7
    // Predicated region
    $region29: #{_pallas_copy.1} parent=5 // pred_check
      %p122 = pneg %p121
    $region30: #{_pallas_copy.1} parent=5 // pred_check_branch
      %124 = sbr.rel (%p122) target = $region32
    $region31: #{_pallas_copy.1} parent=5 // pred_region
      %s125 = ssub.s32 %s7, 2
      // Predicated region
      $region33: #{_pallas_copy.1} parent=31 // pred_check
        %p126 = pneg %p62
      $region34: #{_pallas_copy.1} parent=31 // pred_check_branch
        %128 = sbr.rel (%p126) target = $region36
      $region35: #{_pallas_copy.1} parent=31 // pred_region
        %p129 = scmp.lt.s32.totalorder %s13, 1
        %s130 = scalar_select %p129, %s13, 1
        %s131 = smul.addr %s130, 8
        %s132 = scalar_lea.vmem %s1, %s131
      $region36: #{_pallas_copy.1} parent=31 // pred_fallthru
        _
    $region32: #{_pallas_copy.1} parent=5 // pred_fallthru
      _
  $region6: #{_pallas_copy.1} parent=0 // loop_footer
    %s11 = sadd.s32 1, %s7
  $region7: #{_pallas_copy.1} parent=0 // loop_footer_branch
    %6 = sbr.rel target = $region3
  $region8: #{_pallas_copy.1} parent=0 // loop_exit
    _

</llo_original>
